<compile_context>
chip_gen: v5e
topology: v5e:2x2
jax: 0.10.0
libtpu: 0.0.40
codegen_flags: <defaults>
</compile_context>

<pallas_src>
import jax
import jax.numpy as jnp
from jax.experimental import pallas as pl
from jax.experimental.pallas import tpu as pltpu


def _round_up(x, m):
    return (x + m - 1) // m * m


def _ms_head_kernel(x_ref, mc_ref, wt_ref, b_ref, o_ref):
    # (TB, D): apply the summed {0..dropout_num} keep-mask; all scalar scaling is already
    # folded into wt, so this is a single VPU multiply + bf16 cast.
    xm = (x_ref[...].astype(jnp.float32) * mc_ref[...]).astype(jnp.bfloat16)
    # One MXU matmul per batch tile, f32 accumulation, lane-dense (TB, L_pad=128k) output.
    logits = jnp.dot(xm, wt_ref[...], preferred_element_type=jnp.float32)
    # Bias (already scaled for ms_average / dropout_num) added once, not per dropout sample.
    o_ref[...] = (logits + b_ref[...]).astype(o_ref.dtype)


def multi_sample_classifier(x, weight, bias, key, *, dropout_rate, dropout_num,
                            ms_average, training=True, block_b=256):
    """x: (B, D) float; weight: (L, D) as in nn.Linear; bias: (L,); key: jax PRNG key."""
    B, D = x.shape
    L = weight.shape[0]
    keep_prob = 1.0 - float(dropout_rate)

    # ---- summed dropout keep-masks (host-side jax.random; see TODO above) ----
    if training and dropout_rate > 0.0:
        masks = jax.random.bernoulli(key, p=keep_prob, shape=(int(dropout_num), B, D))
        mask_count = masks.sum(axis=0).astype(jnp.float32)
    else:
        mask_count = jnp.full((B, D), float(dropout_num), jnp.float32)

    # ---- fold all scalar scaling into the tiny weight / bias (hoisted out of kernel) ----
    scale = 1.0 / keep_prob
    bias_mul = float(dropout_num)          # bias is added once per dropout sample
    if ms_average:
        scale /= float(dropout_num)
        bias_mul = 1.0

    # TODO(synk): for very large heads, accept the weight pre-transposed upstream instead of
    # transposing here (extra HBM pass); at L=2 it is negligible.
    L_pad = _round_up(max(L, 1), 128)      # lane-dense output / full MXU N dimension
    wt = jnp.zeros((D, L_pad), jnp.bfloat16).at[:, :L].set(
        (weight.T.astype(jnp.float32) * scale).astype(jnp.bfloat16))
    b_eff = jnp.zeros((1, L_pad), jnp.float32).at[0, :L].set(
        bias.astype(jnp.float32) * bias_mul)

    # ---- batch tiling (sublane-aligned, padded so the grid divides evenly) ----
    TB = min(int(block_b), _round_up(B, 8))
    B_pad = _round_up(B, TB)
    if B_pad != B:
        pad = ((0, B_pad - B), (0, 0))
        x_p = jnp.pad(x, pad)
        mc_p = jnp.pad(mask_count, pad)
    else:
        x_p, mc_p = x, mask_count

    out = pl.pallas_call(
        _ms_head_kernel,
        out_shape=jax.ShapeDtypeStruct((B_pad, L_pad), x.dtype),
        grid=(B_pad // TB,),
        in_specs=[
            pl.BlockSpec((TB, D), lambda i: (i, 0)),       # x batch tile
            pl.BlockSpec((TB, D), lambda i: (i, 0)),       # mask-count batch tile
            pl.BlockSpec((D, L_pad), lambda i: (0, 0)),    # scaled W^T, VMEM-resident
            pl.BlockSpec((1, L_pad), lambda i: (0, 0)),    # effective bias, VMEM-resident
        ],
        out_specs=pl.BlockSpec((TB, L_pad), lambda i: (i, 0)),
        compiler_params=pltpu.CompilerParams(
            dimension_semantics=("parallel",)),            # shard batch across v7x cores
    )(x_p, mc_p, wt, b_eff)

    return out[:B, :L]


if __name__ == "__main__":
    # args equivalent
    dropout_rate = 0.1
    dropout_num = 4
    ms_average = True

    # module defaults: input_dim=128, num_labels=2
    batch, input_dim, num_labels = 8, 128, 2

    root = jax.random.PRNGKey(0)
    kx, kw, kb, kd = jax.random.split(root, 4)
    x = jax.random.normal(kx, (batch, input_dim), dtype=jnp.float32)
    weight = jax.random.normal(kw, (num_labels, input_dim), dtype=jnp.float32) * 0.02
    bias = jax.random.normal(kb, (num_labels,), dtype=jnp.float32) * 0.01

    logits = multi_sample_classifier(
        x, weight, bias, kd,
        dropout_rate=dropout_rate, dropout_num=dropout_num, ms_average=ms_average)
    jax.block_until_ready(logits)
    assert logits.shape == (batch, num_labels)

    # Cross-check against the mathematically equivalent plain-JAX computation using the
    # SAME dropout masks (loose tolerance covers the bf16 MXU path).
    keep_prob = 1.0 - dropout_rate
    masks = jax.random.bernoulli(kd, p=keep_prob, shape=(dropout_num, batch, input_dim))
    ref = jnp.einsum("sbd,ld->bl",
                     masks.astype(jnp.float32) * x[None, :, :] / keep_prob, weight)
    ref = ref + dropout_num * bias[None, :]
    if ms_average:
        ref = ref / dropout_num
    assert jnp.allclose(logits, ref, atol=5e-2, rtol=5e-2), \
        float(jnp.max(jnp.abs(logits - ref)))

    print("KERNEL_OK")
</pallas_src>

<mosaic_0001>
module attributes {stable_mosaic.version = 11 : i64} {
  func.func @_ms_head_kernel(%arg0: i32, %arg1: memref<8x128xf32, #tpu.memory_space<vmem>>, %arg2: memref<8x128xf32, #tpu.memory_space<vmem>>, %arg3: memref<128x128xbf16, #tpu.memory_space<vmem>>, %arg4: memref<1x128xf32, #tpu.memory_space<vmem>>, %arg5: memref<8x128xf32, #tpu.memory_space<vmem>>) attributes {dimension_semantics = [#tpu.dimension_semantics<parallel>], iteration_bounds = array<i64: 1>, scalar_prefetch = 0 : i64, scratch_operands = 0 : i64, tpu.core_type = #tpu.core_type<tc>, window_params = [{transform_indices = @transform_0, window_bounds = array<i64: 8, 128>}, {transform_indices = @transform_1, window_bounds = array<i64: 8, 128>}, {pipeline_mode = #tpu.pipeline_mode<synchronous>, transform_indices = @transform_2, window_bounds = array<i64: 128, 128>}, {pipeline_mode = #tpu.pipeline_mode<synchronous>, transform_indices = @transform_3, window_bounds = array<i64: 1, 128>}, {transform_indices = @transform_4, window_bounds = array<i64: 8, 128>}]} {
    %c0 = arith.constant 0 : index
    %c0_0 = arith.constant 0 : index
    %0 = vector.load %arg1[%c0, %c0_0] : memref<8x128xf32, #tpu.memory_space<vmem>>, vector<8x128xf32>
    %c0_1 = arith.constant 0 : index
    %c0_2 = arith.constant 0 : index
    %1 = vector.load %arg2[%c0_1, %c0_2] : memref<8x128xf32, #tpu.memory_space<vmem>>, vector<8x128xf32>
    %2 = arith.mulf %0, %1 : vector<8x128xf32>
    %3 = arith.truncf %2 : vector<8x128xf32> to vector<8x128xbf16>
    %c0_3 = arith.constant 0 : index
    %c0_4 = arith.constant 0 : index
    %4 = vector.load %arg3[%c0_3, %c0_4] : memref<128x128xbf16, #tpu.memory_space<vmem>>, vector<128x128xbf16>
    %cst = arith.constant dense<0.000000e+00> : vector<8x128xf32>
    %5 = tpu.matmul %3, %4, %cst {dimension_numbers = #tpu.dot_dimension_numbers<[1], [0], [0], [1], [0, 0, 1, 1], [], []>} : vector<8x128xbf16>, vector<128x128xbf16>, vector<8x128xf32> -> vector<8x128xf32>
    %c0_5 = arith.constant 0 : index
    %c0_6 = arith.constant 0 : index
    %6 = vector.load %arg4[%c0_5, %c0_6] : memref<1x128xf32, #tpu.memory_space<vmem>>, vector<1x128xf32>
    %7 = vector.broadcast %6 : vector<1x128xf32> to vector<8x128xf32>
    %8 = arith.addf %5, %7 : vector<8x128xf32>
    %c0_7 = arith.constant 0 : index
    %c0_8 = arith.constant 0 : index
    %9 = vector.load %arg5[%c0_7, %c0_8] : memref<8x128xf32, #tpu.memory_space<vmem>>, vector<8x128xf32>
    tpu.vector_store %arg5[%c0_7, %c0_8], %8 {strides = array<i32>} : memref<8x128xf32, #tpu.memory_space<vmem>>, vector<8x128xf32>,
    return
  }
  func.func @transform_0(%arg0: i32) -> (i32, i32) {
    %c0_i32 = arith.constant 0 : i32
    %c0_i32_0 = arith.constant 0 : i32
    return %arg0, %c0_i32 : i32, i32
  }
  func.func @transform_1(%arg0: i32) -> (i32, i32) {
    %c0_i32 = arith.constant 0 : i32
    %c0_i32_0 = arith.constant 0 : i32
    return %arg0, %c0_i32 : i32, i32
  }
  func.func @transform_2(%arg0: i32) -> (i32, i32) {
    %c0_i32 = arith.constant 0 : i32
    %c0_i32_0 = arith.constant 0 : i32
    %c0_i32_1 = arith.constant 0 : i32
    return %c0_i32, %c0_i32_0 : i32, i32
  }
  func.func @transform_3(%arg0: i32) -> (i32, i32) {
    %c0_i32 = arith.constant 0 : i32
    %c0_i32_0 = arith.constant 0 : i32
    %c0_i32_1 = arith.constant 0 : i32
    return %c0_i32, %c0_i32_0 : i32, i32
  }
  func.func @transform_4(%arg0: i32) -> (i32, i32) {
    %c0_i32 = arith.constant 0 : i32
    %c0_i32_0 = arith.constant 0 : i32
    return %arg0, %c0_i32 : i32, i32
  }
}

</mosaic_0001>

<llo_original>
// kernel: tpu_custom_call.1
$region0: #{tpu_custom_call.1}
  #allocation0 [shape = 'u32[]', space=smem, size = 0x4, offset = 0x4, fixed_abs, tag = 'smem constant byte address 0x4 - core index']
  #allocation1 [shape = 'u32[72,128]{1,0:T(1,128)}', space=vmem, size = 0x9000, scoped, tag = 'internal scratch']
  %s0 = inlined_call_operand.hbm [shape: f32[8,128], index: 0, kind: input, shape index: {}]
  %s1 = inlined_call_operand.hbm [shape: f32[8,128], index: 1, kind: input, shape index: {}]
  %s2 = inlined_call_operand.hbm [shape: bf16[128,128], index: 2, kind: input, shape index: {}]
  %s3 = inlined_call_operand.vmem [shape: f32[1,128], index: 3, kind: input, shape index: {}]
  %s4 = inlined_call_operand.hbm [shape: f32[8,128], index: 4, kind: output, shape index: {}]
  %s5 = sld [smem:[#allocation0]]
  $region38: #{tpu_custom_call.1} parent=0
    _
  %s7 = ssub.s32 1, %s5
  %s8 = scalar_select 0, %s7, %s5
  $region1: #{tpu_custom_call.1} parent=0
    #allocation2 [shape = 'u8[4096]{0}', space=vmem, size = 0x1000, scoped, tag = 'input window, operand 0, single buffered']
    #allocation3 [shape = 's32[1]{0}', space=sflag, size = 0x4, scoped, tag = 'scoped memory for tpu_custom_call.1']
    #allocation4 [shape = 's32[1]{0}', space=sflag, size = 0x4, scoped, tag = 'scoped memory for tpu_custom_call.1']
    #allocation5 [shape = 'u8[4096]{0}', space=vmem, size = 0x1000, scoped, tag = 'input window, operand 1, single buffered']
    #allocation6 [shape = 's32[1]{0}', space=sflag, size = 0x4, scoped, tag = 'scoped memory for tpu_custom_call.1']
    #allocation7 [shape = 'u8[32768]{0}', space=vmem, size = 0x8000, scoped, tag = 'input window, operand 2, single buffered']
    #allocation8 [shape = 'u8[4096]{0}', space=vmem, size = 0x1000, scoped, tag = 'output window, operand 0, single buffered']
    %9 = vsyncpa [#allocation3], 0
    %10 = vsyncpa [#allocation6], 0
    %11 = vsyncpa [#allocation4], 0
    // Predicated region
    $region2: #{tpu_custom_call.1} parent=1 // pred_check
      _
    $region3: #{tpu_custom_call.1} parent=1 // pred_check_branch
      %13 = sbr.rel (0) target = $region5
    $region4: #{tpu_custom_call.1} parent=1 // pred_region
      %15 = vsyncadd [#allocation3], 0
      %s17 = sshll.u32 %s0, 4
      %s18 = int_to_ptr.hbm [resolvable:$true] %s17
      %s19 = sshll.u32 [#allocation2], 4
      %s20 = int_to_ptr.vmem [resolvable:$true] %s19
      %22 = dma.hbm_to_vmem [thread:$0]  %s18, 128, %s20, [#allocation3]
    $region5: #{tpu_custom_call.1} parent=1 // pred_fallthru
      _
    // Predicated region
    $region6: #{tpu_custom_call.1} parent=1 // pred_check
      _
    $region7: #{tpu_custom_call.1} parent=1 // pred_check_branch
      %24 = sbr.rel (0) target = $region9
    $region8: #{tpu_custom_call.1} parent=1 // pred_region
      %26 = vsyncadd [#allocation6], 0
      %s28 = sshll.u32 %s1, 4
      %s29 = int_to_ptr.hbm [resolvable:$true] %s28
      %s30 = sshll.u32 [#allocation5], 4
      %s31 = int_to_ptr.vmem [resolvable:$true] %s30
      %33 = dma.hbm_to_vmem [thread:$0]  %s29, 128, %s31, [#allocation6]
    $region9: #{tpu_custom_call.1} parent=1 // pred_fallthru
      _
    // Predicated region
    $region10: #{tpu_custom_call.1} parent=1 // pred_check
      _
    $region11: #{tpu_custom_call.1} parent=1 // pred_check_branch
      %35 = sbr.rel (0) target = $region13
    $region12: #{tpu_custom_call.1} parent=1 // pred_region
      %37 = vsyncadd [#allocation6], 0
      %s38 = sshll.u32 %s2, 4
      %s39 = int_to_ptr.hbm [resolvable:$true] %s38
      %s40 = sshll.u32 [#allocation7], 4
      %s41 = int_to_ptr.vmem [resolvable:$true] %s40
      %46 = dma.hbm_to_vmem [thread:$0]  %s39, 1024, %s41, [#allocation6], 64, 64, 4
    $region13: #{tpu_custom_call.1} parent=1 // pred_fallthru
      _
    // Predicated region
    $region14: #{tpu_custom_call.1} parent=1 // pred_check
      _
    $region15: #{tpu_custom_call.1} parent=1 // pred_check_branch
      %48 = sbr.rel (0) target = $region17
    $region16: #{tpu_custom_call.1} parent=1 // pred_region
      _
    $region17: #{tpu_custom_call.1} parent=1 // pred_fallthru
      _
    // Predicated region
    $region18: #{tpu_custom_call.1} parent=1 // pred_check
      _
    $region19: #{tpu_custom_call.1} parent=1 // pred_check_branch
      %50 = sbr.rel (0) target = $region21
    $region20: #{tpu_custom_call.1} parent=1 // pred_region
      %52 = dma.done [#allocation3], 128
    $region21: #{tpu_custom_call.1} parent=1 // pred_fallthru
      _
    // Predicated region
    $region22: #{tpu_custom_call.1} parent=1 // pred_check
      _
    $region23: #{tpu_custom_call.1} parent=1 // pred_check_branch
      %54 = sbr.rel (0) target = $region25
    $region24: #{tpu_custom_call.1} parent=1 // pred_region
      %56 = dma.done [#allocation6], 128
    $region25: #{tpu_custom_call.1} parent=1 // pred_fallthru
      _
    // Predicated region
    $region26: #{tpu_custom_call.1} parent=1 // pred_check
      _
    $region27: #{tpu_custom_call.1} parent=1 // pred_check_branch
      %58 = sbr.rel (0) target = $region29
    $region28: #{tpu_custom_call.1} parent=1 // pred_region
      %60 = dma.done [#allocation6], 1024
    $region29: #{tpu_custom_call.1} parent=1 // pred_fallthru
      _
    %v61 = vld [vmem:[#allocation2] sm:$0xff]
    %v62 = vld [vmem:[#allocation5] sm:$0xff]
    %v63 = vmul.f32 %v61, %v62
    %v64 = vpack.c.bf16 %v63, %v63
    %v65 = vld [vmem:[#allocation7] sm:$0xf]
    %v66 = vld [vmem:[#allocation7 + $0x4] sm:$0xf]
    %v67 = vld [vmem:[#allocation7 + $0x8] sm:$0xf]
    %v68 = vld [vmem:[#allocation7 + $0xc] sm:$0xf]
    %v69 = vld [vmem:[#allocation7 + $0x10] sm:$0xf]
    %v70 = vld [vmem:[#allocation7 + $0x14] sm:$0xf]
    %v71 = vld [vmem:[#allocation7 + $0x18] sm:$0xf]
    %v72 = vld [vmem:[#allocation7 + $0x1c] sm:$0xf]
    %v73 = vld [vmem:[#allocation7 + $0x20] sm:$0xf]
    %v74 = vld [vmem:[#allocation7 + $0x24] sm:$0xf]
    %v75 = vld [vmem:[#allocation7 + $0x28] sm:$0xf]
    %v76 = vld [vmem:[#allocation7 + $0x2c] sm:$0xf]
    %v77 = vld [vmem:[#allocation7 + $0x30] sm:$0xf]
    %v78 = vld [vmem:[#allocation7 + $0x34] sm:$0xf]
    %v79 = vld [vmem:[#allocation7 + $0x38] sm:$0xf]
    %v80 = vld [vmem:[#allocation7 + $0x3c] sm:$0xf]
    %v81 = vld [vmem:[%s3] sm:$0x1]
    %v83 = vperm.slane %v81, 0
    %v101 = vunpack.c.l.b16 %v65
    %v102 = vunpack.c.l.b16 %v66
    %v103 = vunpack.c.l.b16 %v67
    %v104 = vunpack.c.l.b16 %v68
    %v105 = vunpack.c.l.b16 %v69
    %v106 = vunpack.c.l.b16 %v70
    %v107 = vunpack.c.l.b16 %v71
    %v108 = vunpack.c.l.b16 %v72
    %v109 = vunpack.c.l.b16 %v73
    %v110 = vunpack.c.l.b16 %v74
    %v111 = vunpack.c.l.b16 %v75
    %v112 = vunpack.c.l.b16 %v76
    %v113 = vunpack.c.l.b16 %v77
    %v114 = vunpack.c.l.b16 %v78
    %v115 = vunpack.c.l.b16 %v79
    %v116 = vunpack.c.l.b16 %v80
    %v117 = vpack.c.b16 %v102, %v101
    %v118 = vpack.c.b16 %v104, %v103
    %v119 = vpack.c.b16 %v106, %v105
    %v120 = vpack.c.b16 %v108, %v107
    %v121 = vpack.c.b16 %v110, %v109
    %v122 = vpack.c.b16 %v112, %v111
    %v123 = vpack.c.b16 %v114, %v113
    %v124 = vpack.c.b16 %v116, %v115
    %133 = vmatpush.bf16.msra.mxu0 %v124
    %134 = vmatpush.bf16.msra.mxu0 %v123
    %135 = vmatpush.bf16.msra.mxu0 %v122
    %136 = vmatpush.bf16.msra.mxu0 %v121
    %137 = vmatpush.bf16.msra.mxu0 %v120
    %138 = vmatpush.bf16.msra.mxu0 %v119
    %139 = vmatpush.bf16.msra.mxu0 %v118
    %140 = vmatpush.bf16.msra.mxu0 %v117
    %141 = vmatmul.bf16.gmra.mxu0 %v64
    %v142 = vpop.f32.mrf.mxu0
    %v143 = vadd.f32 %v83, %v142
    %v144 = vpop.f32.mrf.mxu0
    %145 = vdwg.mxu0
    %146 = vst [vmem:[#allocation8] sm:$0xff] %v143
    // Predicated region
    $region30: #{tpu_custom_call.1} parent=1 // pred_check
      _
    $region31: #{tpu_custom_call.1} parent=1 // pred_check_branch
      %148 = sbr.rel (0) target = $region33
    $region32: #{tpu_custom_call.1} parent=1 // pred_region
      %150 = vsyncadd [#allocation4], 0
      %s152 = sshll.u32 [#allocation8], 4
      %s153 = int_to_ptr.vmem [resolvable:$true] %s152
      %s154 = sshll.u32 %s4, 4
      %s155 = int_to_ptr.hbm [resolvable:$true] %s154
      %157 = dma.vmem_to_hbm [thread:$0]  %s153, 128, %s155, [#allocation4]
    $region33: #{tpu_custom_call.1} parent=1 // pred_fallthru
      _
    // Predicated region
    $region34: #{tpu_custom_call.1} parent=1 // pred_check
      _
    $region35: #{tpu_custom_call.1} parent=1 // pred_check_branch
      %159 = sbr.rel (0) target = $region37
    $region36: #{tpu_custom_call.1} parent=1 // pred_region
      %161 = dma.done [#allocation4], 128
    $region37: #{tpu_custom_call.1} parent=1 // pred_fallthru
      _
    %162 = vsyncpa [#allocation3], 1
    %163 = vsyncpa [#allocation6], 1
    %164 = vsyncpa [#allocation4], 1

</llo_original>
